<compile_context>
chip_gen: v5e
topology: v5e:2x2
jax: 0.10.0
libtpu: 0.0.40
codegen_flags: <defaults>
</compile_context>

<pallas_src>
import functools

import jax
import jax.numpy as jnp
from jax.experimental import pallas as pl
from jax.experimental.pallas import tpu as pltpu


def attention_kernel(h_ref, s_ref, wq_ref, bq_ref, wk_ref, bk_ref,
                     wf_ref, bf_ref, out_ref, *, T, H):
    """One grid step == one batch element b.

    h_ref   : (1, T, H)   hidden_states[b]
    s_ref   : (1, 1, S)   static_inputs[b]
    wq_ref  : (H, H)      Wq (in, out)      bq_ref : (1, H)
    wk_ref  : (H, H)      Wk (in, out)      bk_ref : (1, H)
    wf_ref  : (S, H)      static_fc (in,out) bf_ref: (1, H)
    out_ref : (1, 1, 2H)  [context | static_features] for batch b
    Weights/biases use constant index_maps -> VMEM-resident across grid steps.
    """
    f32 = jnp.float32
    h = h_ref[0]                                               # (T, H)

    # K projection over all T timesteps: one MXU push, bias as a single VPU add.
    k = jnp.tanh(jnp.dot(h, wk_ref[...], preferred_element_type=f32)
                 + bk_ref[...])                                # (T, H)

    # Q projection ONLY for the last timestep (no wasted Wq / tanh work over T).
    h_last = h_ref[0, T - 1:T, :]                              # (1, H)
    q = jnp.tanh(jnp.dot(h_last, wq_ref[...], preferred_element_type=f32)
                 + bq_ref[...])                                # (1, H)

    # attention scores: q @ k^T -> (1, T).  Real N (=T) on the MXU instead of
    # an N=1 push per batch; at deployment T this is a wide, well-utilized push.
    s = jax.lax.dot_general(q, k, (((1,), (1,)), ((), ())),
                            preferred_element_type=f32)        # (1, T)

    # softmax over T (max-stabilized); divide rides the EUP slot (approx recip).
    m = jnp.max(s, axis=1, keepdims=True)                      # (1, 1)
    e = jnp.exp(s - m)                                         # (1, T)
    denom = jnp.sum(e, axis=1, keepdims=True)                  # (1, 1)
    w = e * pl.reciprocal(denom, approx=True)                  # (1, T)

    # context_vector = w @ hidden[b]  -> MXU matmul, not an XLU sublane reduce.
    ctx = jnp.dot(w, h, preferred_element_type=f32)            # (1, H)

    # static_features = static_fc(static_inputs[b]).
    static = (jnp.dot(s_ref[0], wf_ref[...], preferred_element_type=f32)
              + bf_ref[...])                                   # (1, H)

    # Two plain stores into disjoint lane ranges (no in-kernel concat /
    # lane-shuffle).  At H multiple of 128 these are unmasked vsts.
    out_ref[0, :, 0:H] = ctx.astype(out_ref.dtype)
    out_ref[0, :, H:2 * H] = static.astype(out_ref.dtype)


def attention_forward(hidden_states, static_inputs, params):
    """params = (wq_t, bq, wk_t, bk, wf_t, bf), pre-packed once at init time:
    weights already transposed to (in, out), biases shaped (1, H)."""
    B, T, H = hidden_states.shape
    S = static_inputs.shape[-1]
    wq_t, bq, wk_t, bk, wf_t, bf = params
    f32 = jnp.float32

    h = hidden_states.astype(f32)                              # (B, T, H)
    # Size-1 axis inserted so the last two dims of every block equal the full
    # array dims (satisfies the (8,128) block rule); this reshape is free.
    s3 = static_inputs.astype(f32).reshape(B, 1, S)            # (B, 1, S)

    def resident(shape):
        # Constant index_map -> same block every grid step -> stays in VMEM.
        return pl.BlockSpec(shape, lambda b: (0, 0))

    kernel = functools.partial(attention_kernel, T=T, H=H)

    flops = B * (2 * T * H * H + 2 * H * H + 4 * T * H + 2 * S * H)
    transcendentals = B * (T * H + H + T + 1)
    bytes_accessed = 4 * (B * T * H + B * S + 2 * H * H + S * H + 3 * H
                          + B * 2 * H)

    out3 = pl.pallas_call(
        kernel,
        out_shape=jax.ShapeDtypeStruct((B, 1, 2 * H), f32),
        grid_spec=pltpu.PrefetchScalarGridSpec(
            num_scalar_prefetch=0,
            grid=(B,),
            in_specs=[
                pl.BlockSpec((1, T, H), lambda b: (b, 0, 0)),   # hidden[b]
                pl.BlockSpec((1, 1, S), lambda b: (b, 0, 0)),   # static[b]
                resident((H, H)),                               # Wq
                resident((1, H)),                               # bq
                resident((H, H)),                               # Wk
                resident((1, H)),                               # bk
                resident((S, H)),                               # Wf
                resident((1, H)),                               # bf
            ],
            out_specs=pl.BlockSpec((1, 1, 2 * H), lambda b: (b, 0, 0)),
        ),
        compiler_params=pltpu.CompilerParams(
            dimension_semantics=("parallel",)),   # shard batch across v7x's 2 TCs
        cost_estimate=pl.CostEstimate(
            flops=flops,
            transcendentals=transcendentals,
            bytes_accessed=bytes_accessed),
    )(h, s3, wq_t, bq, wk_t, bk, wf_t, bf)
    return out3.reshape(B, 2 * H)


def init_params(key, hidden_size, static_input_size):
    """Deterministic synthetic init matching torch.nn.Linear parameter shapes.

    Weight packing (torch (out,in) -> (in,out), bias -> (1,H)) is done HERE,
    once, so the per-call path has zero layout plumbing."""
    ks = jax.random.split(key, 6)
    wq = jax.random.normal(ks[0], (hidden_size, hidden_size), jnp.float32) * 0.1
    bq = jax.random.normal(ks[1], (hidden_size,), jnp.float32) * 0.1
    wk = jax.random.normal(ks[2], (hidden_size, hidden_size), jnp.float32) * 0.1
    bk = jax.random.normal(ks[3], (hidden_size,), jnp.float32) * 0.1
    wf = jax.random.normal(ks[4], (hidden_size, static_input_size), jnp.float32) * 0.1
    bf = jax.random.normal(ks[5], (hidden_size,), jnp.float32) * 0.1
    return (wq.T, bq.reshape(1, -1), wk.T, bk.reshape(1, -1),
            wf.T, bf.reshape(1, -1))


def attention_reference(hidden_states, static_inputs, params):
    """Plain-JAX reference mirroring the PyTorch forward exactly."""
    wq_t, bq, wk_t, bk, wf_t, bf = params
    q = jnp.tanh(hidden_states[:, -1, :] @ wq_t + bq)              # (B, H)
    k = jnp.tanh(hidden_states @ wk_t + bk)                        # (B, T, H)
    scores = jnp.einsum("bth,bh->bt", k, q)                        # (B, T)
    w = jax.nn.softmax(scores, axis=1)                             # (B, T)
    ctx = jnp.einsum("bht,bt->bh", hidden_states.transpose(0, 2, 1), w)
    static = static_inputs @ wf_t + bf
    return jnp.concatenate([ctx, static], axis=1)


if __name__ == "__main__":
    B, T, H, S = 2, 8, 32, 16
    key = jax.random.PRNGKey(0)
    k_h, k_s, k_p = jax.random.split(key, 3)

    hidden_states = jax.random.normal(k_h, (B, T, H), jnp.float32)
    static_inputs = jax.random.normal(k_s, (B, S), jnp.float32)
    params = init_params(k_p, H, S)

    fwd = jax.jit(attention_forward)
    out = jax.block_until_ready(fwd(hidden_states, static_inputs, params))

    ref = attention_reference(hidden_states, static_inputs, params)
    assert out.shape == (B, 2 * H)
    # Tolerance accounts for the approximate EUP reciprocal in the softmax
    # (rel err ~1e-4); use approx=False if exact normalization is required.
    assert jnp.allclose(out, ref, atol=2e-3, rtol=2e-3), "mismatch vs reference"

    print("KERNEL_OK")
</pallas_src>

<mosaic_0001>
module attributes {stable_mosaic.version = 11 : i64} {
  func.func @attention_kernel(%arg0: i32, %arg1: memref<1x8x32xf32, #tpu.memory_space<vmem>>, %arg2: memref<1x1x16xf32, #tpu.memory_space<vmem>>, %arg3: memref<32x32xf32, #tpu.memory_space<vmem>>, %arg4: memref<1x32xf32, #tpu.memory_space<vmem>>, %arg5: memref<32x32xf32, #tpu.memory_space<vmem>>, %arg6: memref<1x32xf32, #tpu.memory_space<vmem>>, %arg7: memref<16x32xf32, #tpu.memory_space<vmem>>, %arg8: memref<1x32xf32, #tpu.memory_space<vmem>>, %arg9: memref<1x1x64xf32, #tpu.memory_space<vmem>>) attributes {dimension_semantics = [#tpu.dimension_semantics<parallel>], iteration_bounds = array<i64: 2>, scalar_prefetch = 0 : i64, scratch_operands = 0 : i64, tpu.core_type = #tpu.core_type<tc>, window_params = [{transform_indices = @transform_0, window_bounds = array<i64: 1, 8, 32>}, {transform_indices = @transform_1, window_bounds = array<i64: 1, 1, 16>}, {pipeline_mode = #tpu.pipeline_mode<synchronous>, transform_indices = @transform_2, window_bounds = array<i64: 32, 32>}, {pipeline_mode = #tpu.pipeline_mode<synchronous>, transform_indices = @transform_3, window_bounds = array<i64: 1, 32>}, {pipeline_mode = #tpu.pipeline_mode<synchronous>, transform_indices = @transform_4, window_bounds = array<i64: 32, 32>}, {pipeline_mode = #tpu.pipeline_mode<synchronous>, transform_indices = @transform_5, window_bounds = array<i64: 1, 32>}, {pipeline_mode = #tpu.pipeline_mode<synchronous>, transform_indices = @transform_6, window_bounds = array<i64: 16, 32>}, {pipeline_mode = #tpu.pipeline_mode<synchronous>, transform_indices = @transform_7, window_bounds = array<i64: 1, 32>}, {transform_indices = @transform_8, window_bounds = array<i64: 1, 1, 64>}]} {
    %c0 = arith.constant 0 : index
    %c0_0 = arith.constant 0 : index
    %c0_1 = arith.constant 0 : index
    %0 = vector.load %arg1[%c0, %c0_0, %c0_1] : memref<1x8x32xf32, #tpu.memory_space<vmem>>, vector<1x8x32xf32>
    %1 = vector.shape_cast %0 : vector<1x8x32xf32> to vector<8x32xf32>
    %c0_2 = arith.constant 0 : index
    %c0_3 = arith.constant 0 : index
    %2 = vector.load %arg5[%c0_2, %c0_3] : memref<32x32xf32, #tpu.memory_space<vmem>>, vector<32x32xf32>
    %cst = arith.constant dense<0.000000e+00> : vector<8x32xf32>
    %3 = tpu.matmul %1, %2, %cst {dimension_numbers = #tpu.dot_dimension_numbers<[1], [0], [0], [1], [0, 0, 1, 1], [], []>} : vector<8x32xf32>, vector<32x32xf32>, vector<8x32xf32> -> vector<8x32xf32>
    %c0_4 = arith.constant 0 : index
    %c0_5 = arith.constant 0 : index
    %4 = vector.load %arg6[%c0_4, %c0_5] : memref<1x32xf32, #tpu.memory_space<vmem>>, vector<1x32xf32>
    %5 = vector.broadcast %4 : vector<1x32xf32> to vector<8x32xf32>
    %6 = arith.addf %3, %5 : vector<8x32xf32>
    %7 = math.tanh %6 : vector<8x32xf32>
    %c0_6 = arith.constant 0 : index
    %c7 = arith.constant 7 : index
    %c0_7 = arith.constant 0 : index
    %8 = vector.load %arg1[%c0_6, %c7, %c0_7] : memref<1x8x32xf32, #tpu.memory_space<vmem>>, vector<1x1x32xf32>
    %9 = vector.shape_cast %8 : vector<1x1x32xf32> to vector<1x32xf32>
    %c0_8 = arith.constant 0 : index
    %c0_9 = arith.constant 0 : index
    %10 = vector.load %arg3[%c0_8, %c0_9] : memref<32x32xf32, #tpu.memory_space<vmem>>, vector<32x32xf32>
    %cst_10 = arith.constant dense<0.000000e+00> : vector<1x32xf32>
    %11 = tpu.matmul %9, %10, %cst_10 {dimension_numbers = #tpu.dot_dimension_numbers<[1], [0], [0], [1], [0, 0, 1, 1], [], []>} : vector<1x32xf32>, vector<32x32xf32>, vector<1x32xf32> -> vector<1x32xf32>
    %c0_11 = arith.constant 0 : index
    %c0_12 = arith.constant 0 : index
    %12 = vector.load %arg4[%c0_11, %c0_12] : memref<1x32xf32, #tpu.memory_space<vmem>>, vector<1x32xf32>
    %13 = arith.addf %11, %12 : vector<1x32xf32>
    %14 = math.tanh %13 : vector<1x32xf32>
    %cst_13 = arith.constant dense<0.000000e+00> : vector<1x8xf32>
    %15 = tpu.matmul %14, %7, %cst_13 {dimension_numbers = #tpu.dot_dimension_numbers<[1], [1], [0], [0], [0, 0, 1, 0], [], []>} : vector<1x32xf32>, vector<8x32xf32>, vector<1x8xf32> -> vector<1x8xf32>
    %cst_14 = arith.constant dense<0xFF800000> : vector<1xf32>
    %16 = vector.multi_reduction <maximumf>, %15, %cst_14 [1] : vector<1x8xf32> to vector<1xf32>
    %17 = vector.shape_cast %16 : vector<1xf32> to vector<1x1xf32>
    %18 = vector.broadcast %17 : vector<1x1xf32> to vector<1x8xf32>
    %19 = arith.subf %15, %18 : vector<1x8xf32>
    %20 = math.exp %19 : vector<1x8xf32>
    %cst_15 = arith.constant dense<0.000000e+00> : vector<1xf32>
    %21 = vector.multi_reduction <add>, %20, %cst_15 [1] : vector<1x8xf32> to vector<1xf32>
    %22 = vector.shape_cast %21 : vector<1xf32> to vector<1x1xf32>
    %23 = tpu.reciprocal %22 {approx = true} : vector<1x1xf32> -> vector<1x1xf32>
    %24 = vector.broadcast %23 : vector<1x1xf32> to vector<1x8xf32>
    %25 = arith.mulf %20, %24 : vector<1x8xf32>
    %cst_16 = arith.constant dense<0.000000e+00> : vector<1x32xf32>
    %26 = tpu.matmul %25, %1, %cst_16 {dimension_numbers = #tpu.dot_dimension_numbers<[1], [0], [0], [1], [0, 0, 1, 1], [], []>} : vector<1x8xf32>, vector<8x32xf32>, vector<1x32xf32> -> vector<1x32xf32>
    %c0_17 = arith.constant 0 : index
    %c0_18 = arith.constant 0 : index
    %c0_19 = arith.constant 0 : index
    %27 = vector.load %arg2[%c0_17, %c0_18, %c0_19] : memref<1x1x16xf32, #tpu.memory_space<vmem>>, vector<1x1x16xf32>
    %28 = vector.shape_cast %27 : vector<1x1x16xf32> to vector<1x16xf32>
    %c0_20 = arith.constant 0 : index
    %c0_21 = arith.constant 0 : index
    %29 = vector.load %arg7[%c0_20, %c0_21] : memref<16x32xf32, #tpu.memory_space<vmem>>, vector<16x32xf32>
    %cst_22 = arith.constant dense<0.000000e+00> : vector<1x32xf32>
    %30 = tpu.matmul %28, %29, %cst_22 {dimension_numbers = #tpu.dot_dimension_numbers<[1], [0], [0], [1], [0, 0, 1, 1], [], []>} : vector<1x16xf32>, vector<16x32xf32>, vector<1x32xf32> -> vector<1x32xf32>
    %c0_23 = arith.constant 0 : index
    %c0_24 = arith.constant 0 : index
    %31 = vector.load %arg8[%c0_23, %c0_24] : memref<1x32xf32, #tpu.memory_space<vmem>>, vector<1x32xf32>
    %32 = arith.addf %30, %31 : vector<1x32xf32>
    %c0_25 = arith.constant 0 : index
    %c0_26 = arith.constant 0 : index
    %c0_27 = arith.constant 0 : index
    %33 = vector.load %arg9[%c0_25, %c0_26, %c0_27] : memref<1x1x64xf32, #tpu.memory_space<vmem>>, vector<1x1x32xf32>
    %34 = vector.shape_cast %33 : vector<1x1x32xf32> to vector<1x32xf32>
    %35 = vector.shape_cast %26 : vector<1x32xf32> to vector<1x1x32xf32>
    tpu.vector_store %arg9[%c0_25, %c0_26, %c0_27], %35 {strides = array<i32>} : memref<1x1x64xf32, #tpu.memory_space<vmem>>, vector<1x1x32xf32>,
    %c0_28 = arith.constant 0 : index
    %c0_29 = arith.constant 0 : index
    %c32 = arith.constant 32 : index
    %36 = vector.load %arg9[%c0_28, %c0_29, %c32] : memref<1x1x64xf32, #tpu.memory_space<vmem>>, vector<1x1x32xf32>
    %37 = vector.shape_cast %36 : vector<1x1x32xf32> to vector<1x32xf32>
    %38 = vector.shape_cast %32 : vector<1x32xf32> to vector<1x1x32xf32>
    tpu.vector_store %arg9[%c0_28, %c0_29, %c32], %38 {strides = array<i32>} : memref<1x1x64xf32, #tpu.memory_space<vmem>>, vector<1x1x32xf32>,
    return
  }
  func.func @transform_0(%arg0: i32) -> (i32, i32, i32) {
    %c0_i32 = arith.constant 0 : i32
    %c0_i32_0 = arith.constant 0 : i32
    %c0_i32_1 = arith.constant 0 : i32
    return %arg0, %c0_i32, %c0_i32_0 : i32, i32, i32
  }
  func.func @transform_1(%arg0: i32) -> (i32, i32, i32) {
    %c0_i32 = arith.constant 0 : i32
    %c0_i32_0 = arith.constant 0 : i32
    %c0_i32_1 = arith.constant 0 : i32
    return %arg0, %c0_i32, %c0_i32_0 : i32, i32, i32
  }
  func.func @transform_2(%arg0: i32) -> (i32, i32) {
    %c0_i32 = arith.constant 0 : i32
    %c0_i32_0 = arith.constant 0 : i32
    %c0_i32_1 = arith.constant 0 : i32
    return %c0_i32, %c0_i32_0 : i32, i32
  }
  func.func @transform_3(%arg0: i32) -> (i32, i32) {
    %c0_i32 = arith.constant 0 : i32
    %c0_i32_0 = arith.constant 0 : i32
    %c0_i32_1 = arith.constant 0 : i32
    return %c0_i32, %c0_i32_0 : i32, i32
  }
  func.func @transform_4(%arg0: i32) -> (i32, i32) {
    %c0_i32 = arith.constant 0 : i32
    %c0_i32_0 = arith.constant 0 : i32
    %c0_i32_1 = arith.constant 0 : i32
    return %c0_i32, %c0_i32_0 : i32, i32
  }
  func.func @transform_5(%arg0: i32) -> (i32, i32) {
    %c0_i32 = arith.constant 0 : i32
    %c0_i32_0 = arith.constant 0 : i32
    %c0_i32_1 = arith.constant 0 : i32
    return %c0_i32, %c0_i32_0 : i32, i32
  }
  func.func @transform_6(%arg0: i32) -> (i32, i32) {
    %c0_i32 = arith.constant 0 : i32
    %c0_i32_0 = arith.constant 0 : i32
    %c0_i32_1 = arith.constant 0 : i32
    return %c0_i32, %c0_i32_0 : i32, i32
  }
  func.func @transform_7(%arg0: i32) -> (i32, i32) {
    %c0_i32 = arith.constant 0 : i32
    %c0_i32_0 = arith.constant 0 : i32
    %c0_i32_1 = arith.constant 0 : i32
    return %c0_i32, %c0_i32_0 : i32, i32
  }
  func.func @transform_8(%arg0: i32) -> (i32, i32, i32) {
    %c0_i32 = arith.constant 0 : i32
    %c0_i32_0 = arith.constant 0 : i32
    %c0_i32_1 = arith.constant 0 : i32
    return %arg0, %c0_i32, %c0_i32_0 : i32, i32, i32
  }
}

</mosaic_0001>

<llo_original>
// kernel: attention_forward.1
$region0: #{attention_forward.1}
  #allocation0 [shape = 'u32[]', space=smem, size = 0x4, offset = 0x4, fixed_abs, tag = 'smem constant byte address 0x4 - core index']
  #allocation1 [shape = 'u32[72,128]{1,0:T(1,128)}', space=vmem, size = 0x9000, scoped, tag = 'internal scratch']
  %s0 = inlined_call_operand.hbm [shape: f32[2,8,32], index: 0, kind: input, shape index: {}]
  %s1 = inlined_call_operand.hbm [shape: f32[2,1,16], index: 1, kind: input, shape index: {}]
  %s2 = inlined_call_operand.hbm [shape: f32[32,32], index: 2, kind: input, shape index: {}]
  %s3 = inlined_call_operand.vmem [shape: f32[1,32], index: 3, kind: input, shape index: {}]
  %s4 = inlined_call_operand.hbm [shape: f32[32,32], index: 4, kind: input, shape index: {}]
  %s5 = inlined_call_operand.vmem [shape: f32[1,32], index: 5, kind: input, shape index: {}]
  %s6 = inlined_call_operand.hbm [shape: f32[16,32], index: 6, kind: input, shape index: {}]
  %s7 = inlined_call_operand.vmem [shape: f32[1,32], index: 7, kind: input, shape index: {}]
  %s8 = inlined_call_operand.hbm [shape: f32[2,1,64], index: 8, kind: output, shape index: {}]
  %s9 = sld [smem:[#allocation0]]
  $region85: #{attention_forward.1} parent=0
    _
  %s11 = ssub.s32 1, %s9
  %s12 = scalar_select 0, %s11, %s9
  $region1: #{attention_forward.1} parent=0
    #allocation2 [shape = 'u8[8192]{0}', space=vmem, size = 0x2000, scoped, tag = 'input window, operand 0']
    #allocation3 [shape = 's32[2]{0}', space=sflag, size = 0x8, scoped, tag = 'scoped memory for attention_forward.1']
    #allocation4 [shape = 's32[2]{0}', space=sflag, size = 0x8, scoped, tag = 'scoped memory for attention_forward.1']
    #allocation5 [shape = 'u8[1024]{0}', space=vmem, size = 0x400, scoped, tag = 'input window, operand 1']
    #allocation6 [shape = 's32[2]{0}', space=sflag, size = 0x8, scoped, tag = 'scoped memory for attention_forward.1']
    #allocation7 [shape = 'u8[16384]{0}', space=vmem, size = 0x4000, scoped, tag = 'input window, operand 2, single buffered']
    #allocation8 [shape = 'u8[16384]{0}', space=vmem, size = 0x4000, scoped, tag = 'input window, operand 4, single buffered']
    #allocation9 [shape = 's32[1]{0}', space=sflag, size = 0x4, scoped, tag = 'scoped memory for attention_forward.1']
    #allocation10 [shape = 'u8[8192]{0}', space=vmem, size = 0x2000, scoped, tag = 'input window, operand 6, single buffered']
    #allocation11 [shape = 'u8[1024]{0}', space=vmem, size = 0x400, scoped, tag = 'output window, operand 0']
    %13 = vsyncpa [#allocation3], 0
    %s14 = scalar_lea.sflag [#allocation3], 1
    %15 = vsyncpa %s14, 0
    %16 = vsyncpa [#allocation6], 0
    %s17 = scalar_lea.sflag [#allocation6], 1
    %18 = vsyncpa %s17, 0
    %19 = vsyncpa [#allocation9], 0
    %20 = vsyncpa [#allocation4], 0
    %s21 = scalar_lea.sflag [#allocation4], 1
    %22 = vsyncpa %s21, 0
    loop: start=0, step=1, limit=4
    $region2: #{attention_forward.1} parent=1 // loop_pre_header
      _
    $region3: #{attention_forward.1} parent=1 // loop_header
      %s24 = sphi 0, %s28
      %p25 = scmp.ge.s32.totalorder %s24, 4
      %s34 = sphi 0, %s36
      %s37 = sphi 0, %s34
      %s38 = sphi 0, %s37
      %s54 = sphi 0, %s38
      %s60 = sphi 0, %s62
      %s63 = sphi 0, %s60
      %s64 = sphi 0, %s63
      %s80 = sphi 0, %s64
      %s84 = sphi 0, %s84
      %s86 = sphi 0, %s84
      %s87 = sphi 0, %s86
      %s101 = sphi 0, %s87
      %s105 = sphi 0, %s105
      %s107 = sphi 0, %s105
      %s108 = sphi 0, %s107
      %s122 = sphi 0, %s108
      %s126 = sphi 0, %s126
      %s128 = sphi 0, %s126
      %s129 = sphi 0, %s128
      %s143 = sphi 0, %s129
      %s147 = sphi 0, %s147
      %s149 = sphi 0, %s147
      %s150 = sphi 0, %s149
      %s164 = sphi 0, %s150
      %s168 = sphi 0, %s168
      %s170 = sphi 0, %s168
      %s171 = sphi 0, %s170
      %s185 = sphi 0, %s171
      %s189 = sphi 0, %s189
      %s191 = sphi 0, %s189
      %s192 = sphi 0, %s191
      %s206 = sphi 0, %s192
      %s212 = sphi 0, %s214
      %s215 = sphi 0, %s212
      %s216 = sphi 0, %s215
      %s232 = sphi 0, %s216
    $region4: #{attention_forward.1} parent=1 // loop_header_branch
      %27 = sbr.rel (%p25) target = $region8
    $region5: #{attention_forward.1} parent=1 // loop_body
      %s29 = ssub.s32 %s24, 1
      %s30 = ssub.s32 %s24, 2
      %s31 = sadd.s32 %s24, 1
      %s32 = ssub.s32 %s24, %s31
      %p33 = scmp.eq.s32.totalorder %s32, 0
      %s35 = sadd.s32 %s34, 1
      %s36 = scalar_select %p33, %s34, %s35
      %p39 = pneg %p33
      %p40 = scmp.eq.s32.totalorder %s24, 1
      %p41 = por %p39, %p40
      %p42 = scmp.ne.s32.totalorder %s34, %s37
      %p43 = scmp.eq.s32.totalorder %s24, 0
      %p44 = por %p42, %p43
      %p45 = scmp.ne.s32.totalorder %s34, %s37
      %p46 = scmp.eq.s32.totalorder %s29, 1
      %p47 = por %p45, %p46
      %p48 = scmp.ne.s32.totalorder %s37, %s38
      %p49 = scmp.eq.s32.totalorder %s29, 0
      %p50 = por %p48, %p49
      %p51 = scmp.ne.s32.totalorder %s37, %s38
      %p52 = scmp.eq.s32.totalorder %s30, 1
      %p53 = por %p51, %p52
      %p55 = scmp.ne.s32.totalorder %s38, %s54
      %p56 = scmp.eq.s32.totalorder %s30, 0
      %p57 = por %p55, %p56
      %s58 = ssub.s32 %s24, %s31
      %p59 = scmp.eq.s32.totalorder %s58, 0
      %s61 = sadd.s32 %s60, 1
      %s62 = scalar_select %p59, %s60, %s61
      %p65 = pneg %p59
      %p66 = scmp.eq.s32.totalorder %s24, 1
      %p67 = por %p65, %p66
      %p68 = scmp.ne.s32.totalorder %s60, %s63
      %p69 = scmp.eq.s32.totalorder %s24, 0
      %p70 = por %p68, %p69
      %p71 = scmp.ne.s32.totalorder %s60, %s63
      %p72 = scmp.eq.s32.totalorder %s29, 1
      %p73 = por %p71, %p72
      %p74 = scmp.ne.s32.totalorder %s63, %s64
      %p75 = scmp.eq.s32.totalorder %s29, 0
      %p76 = por %p74, %p75
      %p77 = scmp.ne.s32.totalorder %s63, %s64
      %p78 = scmp.eq.s32.totalorder %s30, 1
      %p79 = por %p77, %p78
      %p81 = scmp.ne.s32.totalorder %s64, %s80
      %p82 = scmp.eq.s32.totalorder %s30, 0
      %p83 = por %p81, %p82
      %s85 = sadd.s32 %s84, 1
      %p88 = scmp.eq.s32.totalorder %s24, 1
      %p89 = scmp.ne.s32.totalorder %s84, %s86
      %p90 = scmp.eq.s32.totalorder %s24, 0
      %p91 = por %p89, %p90
      %p92 = scmp.ne.s32.totalorder %s84, %s86
      %p93 = scmp.eq.s32.totalorder %s29, 1
      %p94 = por %p92, %p93
      %p95 = scmp.ne.s32.totalorder %s86, %s87
      %p96 = scmp.eq.s32.totalorder %s29, 0
      %p97 = por %p95, %p96
      %p98 = scmp.ne.s32.totalorder %s86, %s87
      %p99 = scmp.eq.s32.totalorder %s30, 1
      %p100 = por %p98, %p99
      %p102 = scmp.ne.s32.totalorder %s87, %s101
      %p103 = scmp.eq.s32.totalorder %s30, 0
      %p104 = por %p102, %p103
      %s106 = sadd.s32 %s105, 1
      %p109 = scmp.eq.s32.totalorder %s24, 1
      %p110 = scmp.ne.s32.totalorder %s105, %s107
      %p111 = scmp.eq.s32.totalorder %s24, 0
      %p112 = por %p110, %p111
      %p113 = scmp.ne.s32.totalorder %s105, %s107
      %p114 = scmp.eq.s32.totalorder %s29, 1
      %p115 = por %p113, %p114
      %p116 = scmp.ne.s32.totalorder %s107, %s108
      %p117 = scmp.eq.s32.totalorder %s29, 0
      %p118 = por %p116, %p117
      %p119 = scmp.ne.s32.totalorder %s107, %s108
      %p120 = scmp.eq.s32.totalorder %s30, 1
      %p121 = por %p119, %p120
      %p123 = scmp.ne.s32.totalorder %s108, %s122
      %p124 = scmp.eq.s32.totalorder %s30, 0
      %p125 = por %p123, %p124
      %s127 = sadd.s32 %s126, 1
      %p130 = scmp.eq.s32.totalorder %s24, 1
      %p131 = scmp.ne.s32.totalorder %s126, %s128
      %p132 = scmp.eq.s32.totalorder %s24, 0
      %p133 = por %p131, %p132
      %p134 = scmp.ne.s32.totalorder %s126, %s128
      %p135 = scmp.eq.s32.totalorder %s29, 1
      %p136 = por %p134, %p135
      %p137 = scmp.ne.s32.totalorder %s128, %s129
      %p138 = scmp.eq.s32.totalorder %s29, 0
      %p139 = por %p137, %p138
      %p140 = scmp.ne.s32.totalorder %s128, %s129
      %p141 = scmp.eq.s32.totalorder %s30, 1
      %p142 = por %p140, %p141
      %p144 = scmp.ne.s32.totalorder %s129, %s143
      %p145 = scmp.eq.s32.totalorder %s30, 0
      %p146 = por %p144, %p145
      %s148 = sadd.s32 %s147, 1
      %p151 = scmp.eq.s32.totalorder %s24, 1
      %p152 = scmp.ne.s32.totalorder %s147, %s149
      %p153 = scmp.eq.s32.totalorder %s24, 0
      %p154 = por %p152, %p153
      %p155 = scmp.ne.s32.totalorder %s147, %s149
      %p156 = scmp.eq.s32.totalorder %s29, 1
      %p157 = por %p155, %p156
      %p158 = scmp.ne.s32.totalorder %s149, %s150
      %p159 = scmp.eq.s32.totalorder %s29, 0
      %p160 = por %p158, %p159
      %p161 = scmp.ne.s32.totalorder %s149, %s150
      %p162 = scmp.eq.s32.totalorder %s30, 1
      %p163 = por %p161, %p162
      %p165 = scmp.ne.s32.totalorder %s150, %s164
      %p166 = scmp.eq.s32.totalorder %s30, 0
      %p167 = por %p165, %p166
      %s169 = sadd.s32 %s168, 1
      %p172 = scmp.eq.s32.totalorder %s24, 1
      %p173 = scmp.ne.s32.totalorder %s168, %s170
      %p174 = scmp.eq.s32.totalorder %s24, 0
      %p175 = por %p173, %p174
      %p176 = scmp.ne.s32.totalorder %s168, %s170
      %p177 = scmp.eq.s32.totalorder %s29, 1
      %p178 = por %p176, %p177
      %p179 = scmp.ne.s32.totalorder %s170, %s171
      %p180 = scmp.eq.s32.totalorder %s29, 0
      %p181 = por %p179, %p180
      %p182 = scmp.ne.s32.totalorder %s170, %s171
      %p183 = scmp.eq.s32.totalorder %s30, 1
      %p184 = por %p182, %p183
      %p186 = scmp.ne.s32.totalorder %s171, %s185
      %p187 = scmp.eq.s32.totalorder %s30, 0
      %p188 = por %p186, %p187
      %s190 = sadd.s32 %s189, 1
      %p193 = scmp.eq.s32.totalorder %s24, 1
      %p194 = scmp.ne.s32.totalorder %s189, %s191
      %p195 = scmp.eq.s32.totalorder %s24, 0
      %p196 = por %p194, %p195
      %p197 = scmp.ne.s32.totalorder %s189, %s191
      %p198 = scmp.eq.s32.totalorder %s29, 1
      %p199 = por %p197, %p198
      %p200 = scmp.ne.s32.totalorder %s191, %s192
      %p201 = scmp.eq.s32.totalorder %s29, 0
      %p202 = por %p200, %p201
      %p203 = scmp.ne.s32.totalorder %s191, %s192
      %p204 = scmp.eq.s32.totalorder %s30, 1
      %p205 = por %p203, %p204
      %p207 = scmp.ne.s32.totalorder %s192, %s206
      %p208 = scmp.eq.s32.totalorder %s30, 0
      %p209 = por %p207, %p208
      %s210 = ssub.s32 %s24, %s31
      %p211 = scmp.eq.s32.totalorder %s210, 0
      %s213 = sadd.s32 %s212, 1
      %s214 = scalar_select %p211, %s212, %s213
      %p217 = pneg %p211
      %p218 = scmp.eq.s32.totalorder %s24, 1
      %p219 = por %p217, %p218
      %p220 = scmp.ne.s32.totalorder %s212, %s215
      %p221 = scmp.eq.s32.totalorder %s24, 0
      %p222 = por %p220, %p221
      %p223 = scmp.ne.s32.totalorder %s212, %s215
      %p224 = scmp.eq.s32.totalorder %s29, 1
      %p225 = por %p223, %p224
      %p226 = scmp.ne.s32.totalorder %s215, %s216
      %p227 = scmp.eq.s32.totalorder %s29, 0
      %p228 = por %p226, %p227
      %p229 = scmp.ne.s32.totalorder %s215, %s216
      %p230 = scmp.eq.s32.totalorder %s30, 1
      %p231 = por %p229, %p230
      %p233 = scmp.ne.s32.totalorder %s216, %s232
      %p234 = scmp.eq.s32.totalorder %s30, 0
      %p235 = por %p233, %p234
      %p236 = scmp.le.s32.totalorder 1, %s24
      %p237 = scmp.lt.s32.totalorder %s24, 3
      %p238 = pnand %p236, %p237
      %p239 = pneg %p238
      // Predicated region
      $region9: #{attention_forward.1} parent=5 // pred_check
        _
      $region10: #{attention_forward.1} parent=5 // pred_check_branch
        %241 = sbr.rel (%p238) target = $region12
      $region11: #{attention_forward.1} parent=5 // pred_region
        %s242 = ssub.s32 %s24, 1
        // Predicated region
        $region13: #{attention_forward.1} parent=11 // pred_check
          %p243 = pneg %p97
        $region14: #{attention_forward.1} parent=11 // pred_check_branch
          %245 = sbr.rel (%p243) target = $region16
        $region15: #{attention_forward.1} parent=11 // pred_region
          %247 = vsyncadd [#allocation6], 0
          %s248 = sshll.u32 %s2, 4
          %s249 = int_to_ptr.hbm [resolvable:$true] %s248
          %s250 = sshll.u32 [#allocation7], 4
          %s251 = int_to_ptr.vmem [resolvable:$true] %s250
          %256 = dma.hbm_to_vmem [thread:$0]  %s249, 512, %s251, [#allocation6], 128, 128, 8
        $region16: #{attention_forward.1} parent=11 // pred_fallthru
          _
        // Predicated region
        $region17: #{attention_forward.1} parent=11 // pred_check
          %p257 = pneg %p118
        $region18: #{attention_forward.1} parent=11 // pred_check_branch
          %259 = sbr.rel (%p257) target = $region20
        $region19: #{attention_forward.1} parent=11 // pred_region
          _
        $region20: #{attention_forward.1} parent=11 // pred_fallthru
          _
        // Predicated region
        $region21: #{attention_forward.1} parent=11 // pred_check
          %p260 = pneg %p139
        $region22: #{attention_forward.1} parent=11 // pred_check_branch
          %262 = sbr.rel (%p260) target = $region24
        $region23: #{attention_forward.1} parent=11 // pred_region
          %264 = vsyncadd [#allocation9], 0
          %s265 = sshll.u32 %s4, 4
          %s266 = int_to_ptr.hbm [resolvable:$true] %s265
          %s267 = sshll.u32 [#allocation8], 4
          %s268 = int_to_ptr.vmem [resolvable:$true] %s267
          %273 = dma.hbm_to_vmem [thread:$0]  %s266, 512, %s268, [#allocation9], 128, 128, 8
        $region24: #{attention_forward.1} parent=11 // pred_fallthru
          _
        // Predicated region
        $region25: #{attention_forward.1} parent=11 // pred_check
          %p274 = pneg %p160
        $region26: #{attention_forward.1} parent=11 // pred_check_branch
          %276 = sbr.rel (%p274) target = $region28
        $region27: #{attention_forward.1} parent=11 // pred_region
          _
        $region28: #{attention_forward.1} parent=11 // pred_fallthru
          _
        // Predicated region
        $region29: #{attention_forward.1} parent=11 // pred_check
          %p277 = pneg %p181
        $region30: #{attention_forward.1} parent=11 // pred_check_branch
          %279 = sbr.rel (%p277) target = $region32
        $region31: #{attention_forward.1} parent=11 // pred_region
          %281 = vsyncadd [#allocation9], 0
          %s282 = sshll.u32 %s6, 4
          %s283 = int_to_ptr.hbm [resolvable:$true] %s282
          %s284 = sshll.u32 [#allocation10], 4
          %s285 = int_to_ptr.vmem [resolvable:$true] %s284
          %290 = dma.hbm_to_vmem [thread:$0]  %s283, 256, %s285, [#allocation9], 128, 128, 8
        $region32: #{attention_forward.1} parent=11 // pred_fallthru
          _
        // Predicated region
        $region33: #{attention_forward.1} parent=11 // pred_check
          %p291 = pneg %p202
        $region34: #{attention_forward.1} parent=11 // pred_check_branch
          %293 = sbr.rel (%p291) target = $region36
        $region35: #{attention_forward.1} parent=11 // pred_region
          _
        $region36: #{attention_forward.1} parent=11 // pred_fallthru
          _
      $region12: #{attention_forward.1} parent=5 // pred_fallthru
        _
      %p294 = scmp.lt.s32.totalorder %s24, 2
      // Predicated region
      $region37: #{attention_forward.1} parent=5 // pred_check
        %p295 = pneg %p294
      $region38: #{attention_forward.1} parent=5 // pred_check_branch
        %297 = sbr.rel (%p295) target = $region40
      $region39: #{attention_forward.1} parent=5 // pred_region
        // Predicated region
        $region41: #{attention_forward.1} parent=39 // pred_check
          %p298 = pneg %p44
        $region42: #{attention_forward.1} parent=39 // pred_check_branch
          %300 = sbr.rel (%p298) target = $region44
        $region43: #{attention_forward.1} parent=39 // pred_region
          %s301 = sand.u32 %s34, 1
          %s302 = scalar_lea.sflag [#allocation3], %s301
          %s303 = sand.u32 %s34, 1
          %s304 = smul.addr %s303, 8
          %s305 = scalar_lea.vmem [#allocation2], %s304
          %307 = vsyncadd %s302, 0
          %s308 = smul.addr %s24, 8
          %s309 = scalar_lea.hbm %s0, %s308
          %s311 = sshll.u32 %s309, 4
          %s312 = int_to_ptr.hbm [resolvable:$true] %s311
          %s313 = sshll.u32 %s305, 4
          %s314 = int_to_ptr.vmem [resolvable:$true] %s313
          %316 = dma.hbm_to_vmem [thread:$0]  %s312, 128, %s314, %s302
        $region44: #{attention_forward.1} parent=39 // pred_fallthru
          _
        // Predicated region
        $region45: #{attention_forward.1} parent=39 // pred_check
          %p317 = pneg %p70
        $region46: #{attention_forward.1} parent=39 // pred_check_branch
          %319 = sbr.rel (%p317) target = $region48
        $region47: #{attention_forward.1} parent=39 // pred_region
          %s320 = sand.u32 %s24, 1
          %s321 = scalar_lea.sflag [#allocation6], %s320
          %s322 = sand.u32 %s60, 1
          %s323 = scalar_lea.vmem [#allocation5], %s322
          %325 = vsyncadd %s321, 0
          %s326 = scalar_lea.hbm %s1, %s24
          %s328 = sshll.u32 %s326, 4
          %s329 = int_to_ptr.hbm [resolvable:$true] %s328
          %s330 = sshll.u32 %s323, 4
          %s331 = int_to_ptr.vmem [resolvable:$true] %s330
          %333 = dma.hbm_to_vmem [thread:$0]  %s329, 16, %s331, %s321
        $region48: #{attention_forward.1} parent=39 // pred_fallthru
          _
      $region40: #{attention_forward.1} parent=5 // pred_fallthru
        _
      %p334 = scmp.le.s32.totalorder 1, %s24
      %p335 = scmp.lt.s32.totalorder %s24, 3
      %p336 = pnand %p334, %p335
      %p337 = pneg %p336
      // Predicated region
      $region49: #{attention_forward.1} parent=5 // pred_check
        _
      $region50: #{attention_forward.1} parent=5 // pred_check_branch
        %339 = sbr.rel (%p336) target = $region52
      $region51: #{attention_forward.1} parent=5 // pred_region
        %s340 = ssub.s32 %s24, 1
        %s341 = sand.u32 %s37, 1
        %s342 = scalar_lea.sflag [#allocation3], %s341
        %s343 = sand.u32 %s37, 1
        %s344 = smul.addr %s343, 8
        %s345 = scalar_lea.vmem [#allocation2], %s344
        // Predicated region
        $region53: #{attention_forward.1} parent=51 // pred_check
          %p346 = pneg %p50
        $region54: #{attention_forward.1} parent=51 // pred_check_branch
          %348 = sbr.rel (%p346) target = $region56
        $region55: #{attention_forward.1} parent=51 // pred_region
          %350 = dma.done %s342, 128
        $region56: #{attention_forward.1} parent=51 // pred_fallthru
          _
        %s351 = sand.u32 %s29, 1
        %s352 = scalar_lea.sflag [#allocation6], %s351
        %s353 = sand.u32 %s63, 1
        %s354 = scalar_lea.vmem [#allocation5], %s353
        // Predicated region
        $region57: #{attention_forward.1} parent=51 // pred_check
          %p355 = pneg %p76
        $region58: #{attention_forward.1} parent=51 // pred_check_branch
          %357 = sbr.rel (%p355) target = $region60
        $region59: #{attention_forward.1} parent=51 // pred_region
          %359 = dma.done %s352, 16
        $region60: #{attention_forward.1} parent=51 // pred_fallthru
          _
        // Predicated region
        $region61: #{attention_forward.1} parent=51 // pred_check
          %p360 = pneg %p97
        $region62: #{attention_forward.1} parent=51 // pred_check_branch
          %362 = sbr.rel (%p360) target = $region64
        $region63: #{attention_forward.1} parent=51 // pred_region
          %364 = dma.done [#allocation6], 512
        $region64: #{attention_forward.1} parent=51 // pred_fallthru
          _
        // Predicated region
        $region65: #{attention_forward.1} parent=51 // pred_check
          %p365 = pneg %p139
        $region66: #{attention_forward.1} parent=51 // pred_check_branch
          %367 = sbr.rel (%p365) target = $region68
        $region67: #{attention_forward.1} parent=51 // pred_region
          %369 = dma.done [#allocation9], 512
        $region68: #{attention_forward.1} parent=51 // pred_fallthru
          _
        // Predicated region
        $region69: #{attention_forward.1} parent=51 // pred_check
          %p370 = pneg %p181
        $region70: #{attention_forward.1} parent=51 // pred_check_branch
          %372 = sbr.rel (%p370) target = $region72
        $region71: #{attention_forward.1} parent=51 // pred_region
          %374 = dma.done [#allocation9], 256
        $region72: #{attention_forward.1} parent=51 // pred_fallthru
          _
        %s375 = sand.u32 %s37, 1
        %s376 = scalar_lea.sflag [#allocation3], %s375
        %s377 = sand.u32 %s37, 1
        %s378 = smul.addr %s377, 8
        %s379 = scalar_lea.vmem [#allocation2], %s378
        %p380 = pneg %p50
        %p381 = pneg %p47
        %s382 = sand.u32 %s29, 1
        %s383 = scalar_lea.sflag [#allocation6], %s382
        %s384 = sand.u32 %s63, 1
        %s385 = scalar_lea.vmem [#allocation5], %s384
        %p386 = pneg %p76
        %p387 = pneg %p73
        %p388 = pneg %p97
        %p389 = pneg %p94
        %p390 = pneg %p118
        %p391 = pneg %p115
        %p392 = pneg %p139
        %p393 = pneg %p136
        %p394 = pneg %p160
        %p395 = pneg %p157
        %p396 = pneg %p181
        %p397 = pneg %p178
        %p398 = pneg %p202
        %p399 = pneg %p199
        %p400 = pneg %p228
        %p401 = pneg %p225
        %s402 = sand.u32 %s215, 1
        %s403 = scalar_lea.sflag [#allocation4], %s402
        %s404 = sand.u32 %s215, 1
        %s405 = scalar_lea.vmem [#allocation11], %s404
        %v406 = vld [vmem:[%s345] sm:$0xff]
        %v407 = vld [vmem:[#allocation8] sm:$0xff]
        %v408 = vld [vmem:[#allocation8 + $0x8] sm:$0xff]
        %v409 = vld [vmem:[#allocation8 + $0x10] sm:$0xff]
        %v410 = vld [vmem:[#allocation8 + $0x18] sm:$0xff]
        %v411 = vld [vmem:[%s5] sm:$0x1]
        %v413 = vperm.slane %v411, 0
        %vm415 = vcmask 261120
        %v417 = vsel %vm415, %v406, 0
        %419 = vmatpush.msra.mxu0 0.0
        %420 = vmatpush.msra.mxu0 0.0
        %421 = vmatpush.msra.mxu0 0.0
        %422 = vmatpush.msra.mxu0 0.0
        %423 = vmatpush.msra.mxu0 0.0
        %424 = vmatpush.msra.mxu0 0.0
        %425 = vmatpush.msra.mxu0 0.0
        %426 = vmatpush.msra.mxu0 0.0
        %427 = vmatpush.msra.mxu0 0.0
        %428 = vmatpush.msra.mxu0 0.0
        %429 = vmatpush.msra.mxu0 0.0
        %430 = vmatpush.msra.mxu0 0.0
        %431 = vmatpush.msra.mxu0 %v410
        %432 = vmatpush.msra.mxu0 %v409
        %433 = vmatpush.msra.mxu0 %v408
        %434 = vmatpush.msra.mxu0 %v407
        %435 = vmatmul.f32.gmra.mxu0 %v417
        %v436 = vpop.f32.mrf.mxu0
        %v437 = vadd.f32 %v413, %v436
        %438 = vdwg.mxu0
        %v439 = vtanh.pop %v437
        %v440 = vld [vmem:[%s345 + $0x7] sm:$0x1]
        %v441 = vld [vmem:[#allocation7] sm:$0xff]
        %v442 = vld [vmem:[#allocation7 + $0x8] sm:$0xff]
        %v443 = vld [vmem:[#allocation7 + $0x10] sm:$0xff]
        %v444 = vld [vmem:[#allocation7 + $0x18] sm:$0xff]
        %v445 = vld [vmem:[%s3] sm:$0x1]
        %v447 = vsel %vm415, %v440, 0
        %449 = vmatpush.msra.mxu0 0.0
        %450 = vmatpush.msra.mxu0 0.0
        %451 = vmatpush.msra.mxu0 0.0
        %452 = vmatpush.msra.mxu0 0.0
        %453 = vmatpush.msra.mxu0 0.0
        %454 = vmatpush.msra.mxu0 0.0
        %455 = vmatpush.msra.mxu0 0.0
        %456 = vmatpush.msra.mxu0 0.0
        %457 = vmatpush.msra.mxu0 0.0
        %458 = vmatpush.msra.mxu0 0.0
        %459 = vmatpush.msra.mxu0 0.0
        %460 = vmatpush.msra.mxu0 0.0
        %461 = vmatpush.msra.mxu0 %v444
        %462 = vmatpush.msra.mxu0 %v443
        %463 = vmatpush.msra.mxu0 %v442
        %464 = vmatpush.msra.mxu0 %v441
        %465 = vmatmul.f32.gmra.mxu0 %v447
        %v466 = vpop.f32.mrf.mxu0
        %v467 = vadd.f32 %v445, %v466
        %468 = vdwg.mxu0
        %v469 = vtanh.pop %v467
        %v471 = vsel %vm415, %v469, 0
        %v474 = vsel %vm415, %v439, 0
        %476 = vmatpush.xpose.msra.mxu0 0.0
        %477 = vmatpush.xpose.msra.mxu0 0.0
        %478 = vmatpush.xpose.msra.mxu0 0.0
        %479 = vmatpush.xpose.msra.mxu0 0.0
        %480 = vmatpush.xpose.msra.mxu0 0.0
        %481 = vmatpush.xpose.msra.mxu0 0.0
        %482 = vmatpush.xpose.msra.mxu0 0.0
        %483 = vmatpush.xpose.msra.mxu0 0.0
        %484 = vmatpush.xpose.msra.mxu0 0.0
        %485 = vmatpush.xpose.msra.mxu0 0.0
        %486 = vmatpush.xpose.msra.mxu0 0.0
        %487 = vmatpush.xpose.msra.mxu0 0.0
        %488 = vmatpush.xpose.msra.mxu0 0.0
        %489 = vmatpush.xpose.msra.mxu0 0.0
        %490 = vmatpush.xpose.msra.mxu0 0.0
        %491 = vmatpush.xpose.msra.mxu0 %v474
        %492 = vmatmul.f32.gmra.mxu0 %v471
        %v493 = vpop.f32.mrf.mxu0
        %v494 = vadd.f32 0.0, %v493
        %495 = vdwg.mxu0
        %vm496 = vcmask 57344
        %v497 = vsel %vm496, %v494, -inf
        %498 = vmax.xlane.f32.xlu0 %v497
        %v499 = vpop.xlane.xlu0 %498
        %v500 = vsub.f32 %v494, %v499
        %v501 = vmul.f32 %v500, 1.442695
        %v502 = vpow.pop %v501
        %v503 = vsel %vm496, %v502, 0.0
        %504 = vadd.xlane.f32.xlu0 %v503
        %v505 = vpop.xlane.xlu0 %504
        %v506 = vrcp.pop %v505
        %v507 = vmul.f32 %v502, %v506
        %vm508 = vcmask 64512
        %v510 = vsel %vm508, %v507, 0
        %512 = vmatpush.msra.mxu0 0.0
        %513 = vmatpush.msra.mxu0 0.0
        %514 = vmatpush.msra.mxu0 0.0
        %515 = vmatpush.msra.mxu0 0.0
        %516 = vmatpush.msra.mxu0 0.0
        %517 = vmatpush.msra.mxu0 0.0
        %518 = vmatpush.msra.mxu0 0.0
        %519 = vmatpush.msra.mxu0 0.0
        %520 = vmatpush.msra.mxu0 0.0
        %521 = vmatpush.msra.mxu0 0.0
        %522 = vmatpush.msra.mxu0 0.0
        %523 = vmatpush.msra.mxu0 0.0
        %524 = vmatpush.msra.mxu0 0.0
        %525 = vmatpush.msra.mxu0 0.0
        %526 = vmatpush.msra.mxu0 0.0
        %527 = vmatpush.msra.mxu0 %v406
        %528 = vmatmul.f32.gmra.mxu0 %v510
        %v529 = vpop.f32.mrf.mxu0
        %v530 = vadd.f32 0.0, %v529
        %531 = vdwg.mxu0
        %v532 = vld [vmem:[%s354] sm:$0x1]
        %v533 = vld [vmem:[#allocation10] sm:$0xff]
        %v534 = vld [vmem:[#allocation10 + $0x8] sm:$0xff]
        %v535 = vld [vmem:[%s7] sm:$0x1]
        %vm536 = vcmask 130048
        %v538 = vsel %vm536, %v532, 0
        %540 = vmatpush.msra.mxu0 0.0
        %541 = vmatpush.msra.mxu0 0.0
        %542 = vmatpush.msra.mxu0 0.0
        %543 = vmatpush.msra.mxu0 0.0
        %544 = vmatpush.msra.mxu0 0.0
        %545 = vmatpush.msra.mxu0 0.0
        %546 = vmatpush.msra.mxu0 0.0
        %547 = vmatpush.msra.mxu0 0.0
        %548 = vmatpush.msra.mxu0 0.0
        %549 = vmatpush.msra.mxu0 0.0
        %550 = vmatpush.msra.mxu0 0.0
        %551 = vmatpush.msra.mxu0 0.0
        %552 = vmatpush.msra.mxu0 0.0
        %553 = vmatpush.msra.mxu0 0.0
        %554 = vmatpush.msra.mxu0 %v534
        %555 = vmatpush.msra.mxu0 %v533
        %556 = vmatmul.f32.gmra.mxu0 %v538
        %v557 = vpop.f32.mrf.mxu0
        %v558 = vadd.f32 %v535, %v557
        %559 = vdwg.mxu0
        %vm560 = vcmask 253952
        %561 = vst.msk [vmem:[%s405] sm:$0x1] %vm560, %v530
        %563 = vrot.lane.b32.xlu0 %v558, 32
        %v564 = vpop.permute.xlu0 %563
        %vm566 = vcmask 516352
        %567 = vst.msk [vmem:[%s405] sm:$0x1] %vm566, %v564
        %s568 = sand.u32 %s215, 1
        %s569 = scalar_lea.sflag [#allocation4], %s568
        %s570 = sand.u32 %s215, 1
        %s571 = scalar_lea.vmem [#allocation11], %s570
        // Predicated region
        $region73: #{attention_forward.1} parent=51 // pred_check
          %p572 = pneg %p225
        $region74: #{attention_forward.1} parent=51 // pred_check_branch
          %574 = sbr.rel (%p572) target = $region76
        $region75: #{attention_forward.1} parent=51 // pred_region
          %576 = vsyncadd %s569, 0
          %s577 = scalar_lea.hbm %s8, %s29
          %s579 = sshll.u32 %s571, 4
          %s580 = int_to_ptr.vmem [resolvable:$true] %s579
          %s581 = sshll.u32 %s577, 4
          %s582 = int_to_ptr.hbm [resolvable:$true] %s581
          %584 = dma.vmem_to_hbm [thread:$0]  %s580, 16, %s582, %s569
        $region76: #{attention_forward.1} parent=51 // pred_fallthru
          _
      $region52: #{attention_forward.1} parent=5 // pred_fallthru
        _
      %p585 = scmp.le.s32.totalorder 2, %s24
      // Predicated region
      $region77: #{attention_forward.1} parent=5 // pred_check
        %p586 = pneg %p585
      $region78: #{attention_forward.1} parent=5 // pred_check_branch
        %588 = sbr.rel (%p586) target = $region80
      $region79: #{attention_forward.1} parent=5 // pred_region
        %s589 = ssub.s32 %s24, 2
        // Predicated region
        $region81: #{attention_forward.1} parent=79 // pred_check
          %p590 = pneg %p231
        $region82: #{attention_forward.1} parent=79 // pred_check_branch
          %592 = sbr.rel (%p590) target = $region84
        $region83: #{attention_forward.1} parent=79 // pred_region
          %s593 = sand.u32 %s216, 1
          %s594 = scalar_lea.sflag [#allocation4], %s593
          %s595 = sand.u32 %s216, 1
          %s596 = scalar_lea.vmem [#allocation11], %s595
          %598 = dma.done %s594, 16
        $region84: #{attention_forward.1} parent=79 // pred_fallthru
          _
      $region80: #{attention_forward.1} parent=5 // pred_fallthru
        _
    $region6: #{attention_forward.1} parent=1 // loop_footer
      %s28 = sadd.s32 1, %s24
    $region7: #{attention_forward.1} parent=1 // loop_footer_branch
      %23 = sbr.rel target = $region3
    $region8: #{attention_forward.1} parent=1 // loop_exit
      _
    %599 = vsyncpa [#allocation3], 1
    %s600 = scalar_lea.sflag [#allocation3], 1
    %601 = vsyncpa %s600, 1
    %602 = vsyncpa [#allocation6], 1
    %s603 = scalar_lea.sflag [#allocation6], 1
    %604 = vsyncpa %s603, 1
    %605 = vsyncpa [#allocation9], 1
    %606 = vsyncpa [#allocation4], 1
    %s607 = scalar_lea.sflag [#allocation4], 1
    %608 = vsyncpa %s607, 1

</llo_original>
